<compile_context>
chip_gen: v7x
topology: tpu7x:2x2x1
jax: 0.10.0
libtpu: 0.0.40
codegen_flags: <defaults>
</compile_context>

<pallas_src>
import functools

import jax
import jax.numpy as jnp
from jax.experimental import pallas as pl
from jax.experimental.pallas import tpu as pltpu


def _supcon_kernel(q_ref, k_ref, yq_ref, yk_ref, o_ref,
                   denom_sc, cnt_sc, sum_sc, *, inv_tau, n, tq, tk):
    # q_ref : (TQ, D_pad) query-row tile (pre-normalized, pre-scaled by sqrt(1/tau))
    # k_ref : (TK, D_pad) streamed key-row tile (same preprocessing)
    # yq_ref: (TQ, 1) query labels;  yk_ref: (1, TK) key labels (float32)
    # o_ref : (TQ, 1) mean log-prob over positives, per query row
    # *_sc  : (TQ, 1) f32 scratch accumulators across the key (reduction) axis
    ki = pl.program_id(1)

    @pl.when(ki == 0)
    def _():
        denom_sc[...] = jnp.zeros_like(denom_sc)
        cnt_sc[...] = jnp.zeros_like(cnt_sc)
        sum_sc[...] = jnp.zeros_like(sum_sc)

    # (TQ, TK) scaled-cosine tile on the MXU. Contract the last (lane) axis of
    # BOTH operands -> no transpose / XLU copy of the key tile.
    sim = jax.lax.dot_general(
        q_ref[...], k_ref[...],
        dimension_numbers=(((1,), (1,)), ((), ())),
        preferred_element_type=jnp.float32)
    shifted = sim - inv_tau            # max-shift: cos <= 1  =>  sim <= 1/tau

    # Global row/col ids: exclude the self-pair (diagonal) and padded key cols.
    row = pl.program_id(0) * tq + jax.lax.broadcasted_iota(jnp.int32, (tq, tk), 0)
    col = ki * tk + jax.lax.broadcasted_iota(jnp.int32, (tq, tk), 1)
    keep = (col != row) & (col < n)

    e = jnp.where(keep, jnp.exp(shifted), 0.0)
    denom_sc[...] += jnp.sum(e, axis=1, keepdims=True)

    # Positive mask: same label, not self, not padding. Float equality is exact
    # for integer labels with |label| < 2^24.
    pos = jnp.where(keep & (yq_ref[...] == yk_ref[...]), 1.0, 0.0)
    cnt_sc[...] += jnp.sum(pos, axis=1, keepdims=True)
    sum_sc[...] += jnp.sum(pos * shifted, axis=1, keepdims=True)

    @pl.when(ki == pl.num_programs(1) - 1)
    def _():
        # mean_{j in P(i)} [ sim_ij - log sum_{k != i} exp(sim_ik) ]
        # (the -1/tau max-shift cancels between the two terms)
        # Rows with no positives give 0/0 = NaN, matching the PyTorch reference.
        o_ref[...] = ((sum_sc[...] - cnt_sc[...] * jnp.log(denom_sc[...]))
                      / cnt_sc[...])


def _round_up(x, m):
    return (x + m - 1) // m * m


def supervised_contrastive_loss(z_i, z_j, y, tau, *, tq=128, tk=256,
                                mxu_dtype=jnp.float32):
    """z_i, z_j: (B, D) embeddings; y: (B,) labels; returns the scalar SupCon loss.

    Implements the y_list='all' branch of the PyTorch module.
    """
    # TODO(synk): the y_list != 'all' branch (explicit class-list positive mask)
    # is not implemented; only the default y_list='all' semantics are covered.
    b, d = z_i.shape
    n = 2 * b
    inv_tau = float(1.0 / tau)

    # --- hoisted preprocessing (once, O(N*D)) --------------------------------
    p = jnp.concatenate([z_i, z_j], axis=0).astype(jnp.float32)        # (N, D)
    pn = p * jax.lax.rsqrt(
        jnp.maximum(jnp.sum(p * p, axis=-1, keepdims=True), 1e-16))    # L2 normalize
    ps = pn * jnp.float32(inv_tau) ** 0.5   # fold temperature into both matmul sides
    y2 = jnp.concatenate([y, y], axis=0).astype(jnp.float32)           # (N,)

    # --- lane-dense padding ---------------------------------------------------
    n_pad = _round_up(max(n, tq), tq)
    if n_pad % tk != 0:          # keep padding minimal; fall back to key tile = tq
        tk = tq
    d_pad = _round_up(d, 128)
    ps_pad = jnp.pad(ps, ((0, n_pad - n), (0, d_pad - d))).astype(mxu_dtype)
    y_col = jnp.pad(y2, (0, n_pad - n), constant_values=-1.0).reshape(n_pad, 1)
    y_row = y_col.reshape(1, n_pad)

    # --- generation-aware VMEM budget ----------------------------------------
    itemsize = jnp.dtype(mxu_dtype).itemsize
    est = (2 * (tq + tk) * d_pad * itemsize      # double-buffered q / k tiles
           + 8 * tq * tk * 4                     # (TQ, TK) f32 temporaries
           + 4 * (2 * tq + 2 * tk + 2 * tq)      # label / output blocks
           + 4 * 3 * tq)                         # scratch accumulators
    try:
        vmem_cap = int(pltpu.get_tpu_info().vmem_capacity_bytes)
    except Exception:  # pragma: no cover - conservative fallback
        vmem_cap = 128 * 1024 * 1024
    vmem_limit = int(min(max(2 * est, 32 * 1024 * 1024), 0.75 * vmem_cap))

    grid = (n_pad // tq, n_pad // tk)
    mlpp = pl.pallas_call(
        functools.partial(_supcon_kernel, inv_tau=inv_tau, n=n, tq=tq, tk=tk),
        out_shape=jax.ShapeDtypeStruct((n_pad, 1), jnp.float32),
        grid=grid,
        in_specs=[
            pl.BlockSpec((tq, d_pad), lambda i, k: (i, 0)),   # query row tile
            pl.BlockSpec((tk, d_pad), lambda i, k: (k, 0)),   # streamed key tile
            pl.BlockSpec((tq, 1), lambda i, k: (i, 0)),       # query labels
            pl.BlockSpec((1, tk), lambda i, k: (0, k)),       # key labels
        ],
        out_specs=pl.BlockSpec((tq, 1), lambda i, k: (i, 0)),
        scratch_shapes=[pltpu.VMEM((tq, 1), jnp.float32),     # softmax denominator
                        pltpu.VMEM((tq, 1), jnp.float32),     # positive count
                        pltpu.VMEM((tq, 1), jnp.float32)],    # positive logit sum
        compiler_params=pltpu.CompilerParams(
            dimension_semantics=("parallel", "arbitrary"),
            vmem_limit_bytes=vmem_limit),
    )(ps_pad, ps_pad, y_col, y_row)

    # Final scalar reduction stays in JAX so the query grid axis is fully parallel.
    return -jnp.mean(mlpp[:n, 0])


def _reference_loss(z_i, z_j, y, tau):
    # Pure-JAX replica of the PyTorch forward (y_list='all').
    p = jnp.concatenate([z_i, z_j], axis=0).astype(jnp.float32)
    n = p.shape[0]
    norm = jnp.sqrt(jnp.sum(p * p, axis=-1, keepdims=True))
    pn = p / jnp.maximum(norm, 1e-8)
    sim = pn @ pn.T / tau
    y2 = jnp.concatenate([y, y], axis=0).reshape(-1, 1)
    mask = (y2 == y2.T).astype(jnp.float32)
    eye = jnp.eye(n, dtype=jnp.float32)
    mask = mask * (1.0 - eye)
    logit_mask = 1.0 - eye
    exp_logits = jnp.exp(sim) * logit_mask
    log_prob = sim - jnp.log(jnp.sum(exp_logits, axis=1, keepdims=True))
    mean_log_prob_pos = jnp.sum(mask * log_prob, axis=1) / jnp.sum(mask, axis=1)
    return -jnp.mean(mean_log_prob_pos)


if __name__ == "__main__":
    B, D = 8, 32
    tau = 0.5

    key = jax.random.PRNGKey(0)
    k1, k2, k3 = jax.random.split(key, 3)
    z_i = jax.random.normal(k1, (B, D), dtype=jnp.float32)
    z_j = jax.random.normal(k2, (B, D), dtype=jnp.float32)
    # Few classes so every sample has at least one positive besides itself.
    y = jax.random.randint(k3, (B,), 0, 3, dtype=jnp.int32)

    loss = jax.block_until_ready(supervised_contrastive_loss(z_i, z_j, y, tau))
    ref = jax.block_until_ready(_reference_loss(z_i, z_j, y, tau))
    assert jnp.allclose(loss, ref, rtol=1e-5, atol=1e-5), (loss, ref)

    print("KERNEL_OK")
</pallas_src>

<mosaic_0001>
module attributes {stable_mosaic.version = 11 : i64} {
  func.func @_supcon_kernel(%arg0: i32, %arg1: i32, %arg2: memref<128x128xf32, #tpu.memory_space<vmem>>, %arg3: memref<128x128xf32, #tpu.memory_space<vmem>>, %arg4: memref<128x1xf32, #tpu.memory_space<vmem>>, %arg5: memref<1x128xf32, #tpu.memory_space<vmem>>, %arg6: memref<128x1xf32, #tpu.memory_space<vmem>>, %arg7: memref<128x1xf32, #tpu.memory_space<vmem>>, %arg8: memref<128x1xf32, #tpu.memory_space<vmem>>, %arg9: memref<128x1xf32, #tpu.memory_space<vmem>>) attributes {dimension_semantics = [#tpu.dimension_semantics<parallel>, #tpu.dimension_semantics<arbitrary>], iteration_bounds = array<i64: 1, 1>, scalar_prefetch = 0 : i64, scratch_operands = 3 : i64, tpu.core_type = #tpu.core_type<tc>, window_params = [{transform_indices = @transform_0, window_bounds = array<i64: 128, 128>}, {transform_indices = @transform_1, window_bounds = array<i64: 128, 128>}, {transform_indices = @transform_2, window_bounds = array<i64: 128, 1>}, {transform_indices = @transform_3, window_bounds = array<i64: 1, 128>}, {transform_indices = @transform_4, window_bounds = array<i64: 128, 1>}]} {
    %c0_i32 = arith.constant 0 : i32
    %0 = arith.cmpi eq, %arg1, %c0_i32 : i32
    %1 = arith.extui %0 : i1 to i32
    %c0_i32_0 = arith.constant 0 : i32
    %2 = arith.cmpi ne, %1, %c0_i32_0 : i32
    scf.if %2 {
      %cst_30 = arith.constant 0.000000e+00 : f32
      %51 = vector.broadcast %cst_30 : f32 to vector<128x1xf32>
      %c0_31 = arith.constant 0 : index
      %c0_32 = arith.constant 0 : index
      %52 = vector.load %arg7[%c0_31, %c0_32] : memref<128x1xf32, #tpu.memory_space<vmem>>, vector<128x1xf32>
      tpu.vector_store %arg7[%c0_31, %c0_32], %51 {strides = array<i32>} : memref<128x1xf32, #tpu.memory_space<vmem>>, vector<128x1xf32>,
      %cst_33 = arith.constant 0.000000e+00 : f32
      %53 = vector.broadcast %cst_33 : f32 to vector<128x1xf32>
      %c0_34 = arith.constant 0 : index
      %c0_35 = arith.constant 0 : index
      %54 = vector.load %arg8[%c0_34, %c0_35] : memref<128x1xf32, #tpu.memory_space<vmem>>, vector<128x1xf32>
      tpu.vector_store %arg8[%c0_34, %c0_35], %53 {strides = array<i32>} : memref<128x1xf32, #tpu.memory_space<vmem>>, vector<128x1xf32>,
      %cst_36 = arith.constant 0.000000e+00 : f32
      %55 = vector.broadcast %cst_36 : f32 to vector<128x1xf32>
      %c0_37 = arith.constant 0 : index
      %c0_38 = arith.constant 0 : index
      %56 = vector.load %arg9[%c0_37, %c0_38] : memref<128x1xf32, #tpu.memory_space<vmem>>, vector<128x1xf32>
      tpu.vector_store %arg9[%c0_37, %c0_38], %55 {strides = array<i32>} : memref<128x1xf32, #tpu.memory_space<vmem>>, vector<128x1xf32>,
    } else {
    }
    %c0 = arith.constant 0 : index
    %c0_1 = arith.constant 0 : index
    %3 = vector.load %arg2[%c0, %c0_1] : memref<128x128xf32, #tpu.memory_space<vmem>>, vector<128x128xf32>
    %c0_2 = arith.constant 0 : index
    %c0_3 = arith.constant 0 : index
    %4 = vector.load %arg3[%c0_2, %c0_3] : memref<128x128xf32, #tpu.memory_space<vmem>>, vector<128x128xf32>
    %cst = arith.constant dense<0.000000e+00> : vector<128x128xf32>
    %5 = tpu.matmul %3, %4, %cst {dimension_numbers = #tpu.dot_dimension_numbers<[1], [1], [0], [0], [0, 0, 1, 0], [], []>} : vector<128x128xf32>, vector<128x128xf32>, vector<128x128xf32> -> vector<128x128xf32>
    %cst_4 = arith.constant 2.000000e+00 : f32
    %6 = vector.broadcast %cst_4 : f32 to vector<128x128xf32>
    %7 = arith.subf %5, %6 : vector<128x128xf32>
    %c128_i32 = arith.constant 128 : i32
    %8 = arith.muli %arg0, %c128_i32 : i32
    %9 = tpu.iota {dimensions = array<i32: 0>} : vector<128x128xi32>
    %10 = vector.broadcast %8 : i32 to vector<128x128xi32>
    %11 = arith.addi %10, %9 : vector<128x128xi32>
    %c128_i32_5 = arith.constant 128 : i32
    %12 = arith.muli %arg1, %c128_i32_5 : i32
    %13 = tpu.iota {dimensions = array<i32: 1>} : vector<128x128xi32>
    %14 = vector.broadcast %12 : i32 to vector<128x128xi32>
    %15 = arith.addi %14, %13 : vector<128x128xi32>
    %16 = arith.cmpi ne, %15, %11 : vector<128x128xi32>
    %c16_i32 = arith.constant 16 : i32
    %17 = vector.broadcast %c16_i32 : i32 to vector<128x128xi32>
    %18 = arith.cmpi slt, %15, %17 : vector<128x128xi32>
    %19 = arith.andi %16, %18 : vector<128x128xi1>
    %20 = math.exp %7 : vector<128x128xf32>
    %cst_6 = arith.constant 0.000000e+00 : f32
    %21 = vector.broadcast %cst_6 : f32 to vector<128x128xf32>
    %22 = arith.select %19, %20, %21 : vector<128x128xi1>, vector<128x128xf32>
    %c0_7 = arith.constant 0 : index
    %c0_8 = arith.constant 0 : index
    %23 = vector.load %arg7[%c0_7, %c0_8] : memref<128x1xf32, #tpu.memory_space<vmem>>, vector<128x1xf32>
    %cst_9 = arith.constant dense<0.000000e+00> : vector<128xf32>
    %24 = vector.multi_reduction <add>, %22, %cst_9 [1] : vector<128x128xf32> to vector<128xf32>
    %25 = vector.shape_cast %24 : vector<128xf32> to vector<128x1xf32>
    %26 = arith.addf %23, %25 : vector<128x1xf32>
    %c0_10 = arith.constant 0 : index
    %c0_11 = arith.constant 0 : index
    %27 = vector.load %arg7[%c0_10, %c0_11] : memref<128x1xf32, #tpu.memory_space<vmem>>, vector<128x1xf32>
    tpu.vector_store %arg7[%c0_10, %c0_11], %26 {strides = array<i32>} : memref<128x1xf32, #tpu.memory_space<vmem>>, vector<128x1xf32>,
    %c0_12 = arith.constant 0 : index
    %c0_13 = arith.constant 0 : index
    %28 = vector.load %arg4[%c0_12, %c0_13] : memref<128x1xf32, #tpu.memory_space<vmem>>, vector<128x1xf32>
    %c0_14 = arith.constant 0 : index
    %c0_15 = arith.constant 0 : index
    %29 = vector.load %arg5[%c0_14, %c0_15] : memref<1x128xf32, #tpu.memory_space<vmem>>, vector<1x128xf32>
    %30 = vector.broadcast %28 : vector<128x1xf32> to vector<128x128xf32>
    %31 = vector.broadcast %29 : vector<1x128xf32> to vector<128x128xf32>
    %32 = arith.cmpf oeq, %30, %31 : vector<128x128xf32>
    %33 = arith.andi %19, %32 : vector<128x128xi1>
    %cst_16 = arith.constant 1.000000e+00 : f32
    %cst_17 = arith.constant 0.000000e+00 : f32
    %34 = vector.broadcast %cst_16 : f32 to vector<128x128xf32>
    %35 = vector.broadcast %cst_17 : f32 to vector<128x128xf32>
    %36 = arith.select %33, %34, %35 : vector<128x128xi1>, vector<128x128xf32>
    %c0_18 = arith.constant 0 : index
    %c0_19 = arith.constant 0 : index
    %37 = vector.load %arg8[%c0_18, %c0_19] : memref<128x1xf32, #tpu.memory_space<vmem>>, vector<128x1xf32>
    %cst_20 = arith.constant dense<0.000000e+00> : vector<128xf32>
    %38 = vector.multi_reduction <add>, %36, %cst_20 [1] : vector<128x128xf32> to vector<128xf32>
    %39 = vector.shape_cast %38 : vector<128xf32> to vector<128x1xf32>
    %40 = arith.addf %37, %39 : vector<128x1xf32>
    %c0_21 = arith.constant 0 : index
    %c0_22 = arith.constant 0 : index
    %41 = vector.load %arg8[%c0_21, %c0_22] : memref<128x1xf32, #tpu.memory_space<vmem>>, vector<128x1xf32>
    tpu.vector_store %arg8[%c0_21, %c0_22], %40 {strides = array<i32>} : memref<128x1xf32, #tpu.memory_space<vmem>>, vector<128x1xf32>,
    %c0_23 = arith.constant 0 : index
    %c0_24 = arith.constant 0 : index
    %42 = vector.load %arg9[%c0_23, %c0_24] : memref<128x1xf32, #tpu.memory_space<vmem>>, vector<128x1xf32>
    %43 = arith.mulf %36, %7 : vector<128x128xf32>
    %cst_25 = arith.constant dense<0.000000e+00> : vector<128xf32>
    %44 = vector.multi_reduction <add>, %43, %cst_25 [1] : vector<128x128xf32> to vector<128xf32>
    %45 = vector.shape_cast %44 : vector<128xf32> to vector<128x1xf32>
    %46 = arith.addf %42, %45 : vector<128x1xf32>
    %c0_26 = arith.constant 0 : index
    %c0_27 = arith.constant 0 : index
    %47 = vector.load %arg9[%c0_26, %c0_27] : memref<128x1xf32, #tpu.memory_space<vmem>>, vector<128x1xf32>
    tpu.vector_store %arg9[%c0_26, %c0_27], %46 {strides = array<i32>} : memref<128x1xf32, #tpu.memory_space<vmem>>, vector<128x1xf32>,
    %c0_i32_28 = arith.constant 0 : i32
    %48 = arith.cmpi eq, %arg1, %c0_i32_28 : i32
    %49 = arith.extui %48 : i1 to i32
    %c0_i32_29 = arith.constant 0 : i32
    %50 = arith.cmpi ne, %49, %c0_i32_29 : i32
    scf.if %50 {
      %c0_30 = arith.constant 0 : index
      %c0_31 = arith.constant 0 : index
      %51 = vector.load %arg9[%c0_30, %c0_31] : memref<128x1xf32, #tpu.memory_space<vmem>>, vector<128x1xf32>
      %c0_32 = arith.constant 0 : index
      %c0_33 = arith.constant 0 : index
      %52 = vector.load %arg8[%c0_32, %c0_33] : memref<128x1xf32, #tpu.memory_space<vmem>>, vector<128x1xf32>
      %c0_34 = arith.constant 0 : index
      %c0_35 = arith.constant 0 : index
      %53 = vector.load %arg7[%c0_34, %c0_35] : memref<128x1xf32, #tpu.memory_space<vmem>>, vector<128x1xf32>
      %54 = math.log %53 : vector<128x1xf32>
      %55 = arith.mulf %52, %54 : vector<128x1xf32>
      %56 = arith.subf %51, %55 : vector<128x1xf32>
      %c0_36 = arith.constant 0 : index
      %c0_37 = arith.constant 0 : index
      %57 = vector.load %arg8[%c0_36, %c0_37] : memref<128x1xf32, #tpu.memory_space<vmem>>, vector<128x1xf32>
      %58 = arith.divf %56, %57 : vector<128x1xf32>
      %c0_38 = arith.constant 0 : index
      %c0_39 = arith.constant 0 : index
      %59 = vector.load %arg6[%c0_38, %c0_39] : memref<128x1xf32, #tpu.memory_space<vmem>>, vector<128x1xf32>
      tpu.vector_store %arg6[%c0_38, %c0_39], %58 {strides = array<i32>} : memref<128x1xf32, #tpu.memory_space<vmem>>, vector<128x1xf32>,
    } else {
    }
    return
  }
  func.func @transform_0(%arg0: i32, %arg1: i32) -> (i32, i32) {
    %c0_i32 = arith.constant 0 : i32
    %c0_i32_0 = arith.constant 0 : i32
    return %arg0, %c0_i32 : i32, i32
  }
  func.func @transform_1(%arg0: i32, %arg1: i32) -> (i32, i32) {
    %c0_i32 = arith.constant 0 : i32
    %c0_i32_0 = arith.constant 0 : i32
    return %arg1, %c0_i32 : i32, i32
  }
  func.func @transform_2(%arg0: i32, %arg1: i32) -> (i32, i32) {
    %c0_i32 = arith.constant 0 : i32
    %c0_i32_0 = arith.constant 0 : i32
    return %arg0, %c0_i32 : i32, i32
  }
  func.func @transform_3(%arg0: i32, %arg1: i32) -> (i32, i32) {
    %c0_i32 = arith.constant 0 : i32
    %c0_i32_0 = arith.constant 0 : i32
    return %c0_i32, %arg1 : i32, i32
  }
  func.func @transform_4(%arg0: i32, %arg1: i32) -> (i32, i32) {
    %c0_i32 = arith.constant 0 : i32
    %c0_i32_0 = arith.constant 0 : i32
    return %arg0, %c0_i32 : i32, i32
  }
}

</mosaic_0001>

<llo_original>
// kernel: tpu_custom_call.1
$region0: #{tpu_custom_call.1}
  #allocation0 [shape = 'u32[]', space=smem, size = 0x4, offset = 0x4, fixed_abs, tag = 'smem constant byte address 0x4 - core index']
  #allocation1 [shape = 'u32[144,128]{1,0:T(1,128)}', space=vmem, size = 0x12000, scoped, tag = 'internal scratch']
  #allocation2 [shape = 'f32[128,1]{1,0:T(8,128)}', space=vmem, size = 0x10000, scoped, tag = 'scratch operand']
  #allocation3 [shape = 'f32[128,1]{1,0:T(8,128)}', space=vmem, size = 0x10000, scoped, tag = 'scratch operand']
  #allocation4 [shape = 'f32[128,1]{1,0:T(8,128)}', space=vmem, size = 0x10000, scoped, tag = 'scratch operand']
  %s0 = inlined_call_operand.vmem [shape: f32[128,128], index: 0, kind: input, shape index: {}]
  %s1 = inlined_call_operand.hbm [shape: f32[128,128], index: 1, kind: input, shape index: {}]
  %s2 = inlined_call_operand.vmem [shape: f32[128,1], index: 2, kind: input, shape index: {}]
  %s3 = inlined_call_operand.vmem [shape: f32[1,128], index: 3, kind: input, shape index: {}]
  %s4 = inlined_call_operand.vmem [shape: f32[128,1], index: 4, kind: output, shape index: {}]
  %s5 = sld [smem:[#allocation0]]
  $region38: #{tpu_custom_call.1} parent=0
    _
  %s7 = ssub.s32 1, %s5
  %s8 = scalar_select 0, %s7, %s5
  $region1: #{tpu_custom_call.1} parent=0
    #allocation5 [shape = 'u8[65536]{0}', space=vmem, size = 0x10000, scoped, tag = 'input window, operand 1, single buffered']
    #allocation6 [shape = 's32[1]{0}', space=sflag, size = 0x4, scoped, tag = 'scoped memory for tpu_custom_call.1']
    %9 = vsyncpa [#allocation6], 0
    // Predicated region
    $region2: #{tpu_custom_call.1} parent=1 // pred_check
      _
    $region3: #{tpu_custom_call.1} parent=1 // pred_check_branch
      %11 = sbr.rel (0) target = $region5
    $region4: #{tpu_custom_call.1} parent=1 // pred_region
      _
    $region5: #{tpu_custom_call.1} parent=1 // pred_fallthru
      _
    // Predicated region
    $region6: #{tpu_custom_call.1} parent=1 // pred_check
      _
    $region7: #{tpu_custom_call.1} parent=1 // pred_check_branch
      %13 = sbr.rel (0) target = $region9
    $region8: #{tpu_custom_call.1} parent=1 // pred_region
      %s15 = ssub.s32 2048, 2048
      %16 = vsyncadd [#allocation6], %s15
      %s17 = sshll.u32 [#allocation5], 4
      %s18 = int_to_ptr.vmem [resolvable:$true] %s17
      %23 = dma.hbm_to_vmem [thread:$0]  %s1, 2048, %s18, [#allocation6], 128, 128, 8
    $region9: #{tpu_custom_call.1} parent=1 // pred_fallthru
      _
    // Predicated region
    $region10: #{tpu_custom_call.1} parent=1 // pred_check
      _
    $region11: #{tpu_custom_call.1} parent=1 // pred_check_branch
      %25 = sbr.rel (0) target = $region13
    $region12: #{tpu_custom_call.1} parent=1 // pred_region
      _
    $region13: #{tpu_custom_call.1} parent=1 // pred_fallthru
      _
    // Predicated region
    $region14: #{tpu_custom_call.1} parent=1 // pred_check
      _
    $region15: #{tpu_custom_call.1} parent=1 // pred_check_branch
      %27 = sbr.rel (0) target = $region17
    $region16: #{tpu_custom_call.1} parent=1 // pred_region
      _
    $region17: #{tpu_custom_call.1} parent=1 // pred_fallthru
      _
    // Predicated region
    $region18: #{tpu_custom_call.1} parent=1 // pred_check
      _
    $region19: #{tpu_custom_call.1} parent=1 // pred_check_branch
      %29 = sbr.rel (0) target = $region21
    $region20: #{tpu_custom_call.1} parent=1 // pred_region
      %30 = dma.done [#allocation6], 2048
    $region21: #{tpu_custom_call.1} parent=1 // pred_fallthru
      _
    %p31 = scmp.eq.s32.totalorder 0, 0
    // Predicated region
    $region22: #{tpu_custom_call.1} parent=1 // pred_check
      %p32 = pneg %p31
    $region23: #{tpu_custom_call.1} parent=1 // pred_check_branch
      %34 = sbr.rel (%p32) target = $region25
    $region24: #{tpu_custom_call.1} parent=1 // pred_region
      %vm35 = vcmask 7168
      %36 = vst.msk [vmem:[#allocation2] sm:$0xff] %vm35, 0.0
      %37 = vst.msk [vmem:[#allocation2 + $0x8] sm:$0xff] %vm35, 0.0
      %38 = vst.msk [vmem:[#allocation2 + $0x10] sm:$0xff] %vm35, 0.0
      %39 = vst.msk [vmem:[#allocation2 + $0x18] sm:$0xff] %vm35, 0.0
      %40 = vst.msk [vmem:[#allocation2 + $0x20] sm:$0xff] %vm35, 0.0
      %41 = vst.msk [vmem:[#allocation2 + $0x28] sm:$0xff] %vm35, 0.0
      %42 = vst.msk [vmem:[#allocation2 + $0x30] sm:$0xff] %vm35, 0.0
      %43 = vst.msk [vmem:[#allocation2 + $0x38] sm:$0xff] %vm35, 0.0
      %44 = vst.msk [vmem:[#allocation2 + $0x40] sm:$0xff] %vm35, 0.0
      %45 = vst.msk [vmem:[#allocation2 + $0x48] sm:$0xff] %vm35, 0.0
      %46 = vst.msk [vmem:[#allocation2 + $0x50] sm:$0xff] %vm35, 0.0
      %47 = vst.msk [vmem:[#allocation2 + $0x58] sm:$0xff] %vm35, 0.0
      %48 = vst.msk [vmem:[#allocation2 + $0x60] sm:$0xff] %vm35, 0.0
      %49 = vst.msk [vmem:[#allocation2 + $0x68] sm:$0xff] %vm35, 0.0
      %50 = vst.msk [vmem:[#allocation2 + $0x70] sm:$0xff] %vm35, 0.0
      %51 = vst.msk [vmem:[#allocation2 + $0x78] sm:$0xff] %vm35, 0.0
      %52 = vst.msk [vmem:[#allocation3] sm:$0xff] %vm35, 0.0
      %53 = vst.msk [vmem:[#allocation3 + $0x8] sm:$0xff] %vm35, 0.0
      %54 = vst.msk [vmem:[#allocation3 + $0x10] sm:$0xff] %vm35, 0.0
      %55 = vst.msk [vmem:[#allocation3 + $0x18] sm:$0xff] %vm35, 0.0
      %56 = vst.msk [vmem:[#allocation3 + $0x20] sm:$0xff] %vm35, 0.0
      %57 = vst.msk [vmem:[#allocation3 + $0x28] sm:$0xff] %vm35, 0.0
      %58 = vst.msk [vmem:[#allocation3 + $0x30] sm:$0xff] %vm35, 0.0
      %59 = vst.msk [vmem:[#allocation3 + $0x38] sm:$0xff] %vm35, 0.0
      %60 = vst.msk [vmem:[#allocation3 + $0x40] sm:$0xff] %vm35, 0.0
      %61 = vst.msk [vmem:[#allocation3 + $0x48] sm:$0xff] %vm35, 0.0
      %62 = vst.msk [vmem:[#allocation3 + $0x50] sm:$0xff] %vm35, 0.0
      %63 = vst.msk [vmem:[#allocation3 + $0x58] sm:$0xff] %vm35, 0.0
      %64 = vst.msk [vmem:[#allocation3 + $0x60] sm:$0xff] %vm35, 0.0
      %65 = vst.msk [vmem:[#allocation3 + $0x68] sm:$0xff] %vm35, 0.0
      %66 = vst.msk [vmem:[#allocation3 + $0x70] sm:$0xff] %vm35, 0.0
      %67 = vst.msk [vmem:[#allocation3 + $0x78] sm:$0xff] %vm35, 0.0
      %68 = vst.msk [vmem:[#allocation4] sm:$0xff] %vm35, 0.0
      %69 = vst.msk [vmem:[#allocation4 + $0x8] sm:$0xff] %vm35, 0.0
      %70 = vst.msk [vmem:[#allocation4 + $0x10] sm:$0xff] %vm35, 0.0
      %71 = vst.msk [vmem:[#allocation4 + $0x18] sm:$0xff] %vm35, 0.0
      %72 = vst.msk [vmem:[#allocation4 + $0x20] sm:$0xff] %vm35, 0.0
      %73 = vst.msk [vmem:[#allocation4 + $0x28] sm:$0xff] %vm35, 0.0
      %74 = vst.msk [vmem:[#allocation4 + $0x30] sm:$0xff] %vm35, 0.0
      %75 = vst.msk [vmem:[#allocation4 + $0x38] sm:$0xff] %vm35, 0.0
      %76 = vst.msk [vmem:[#allocation4 + $0x40] sm:$0xff] %vm35, 0.0
      %77 = vst.msk [vmem:[#allocation4 + $0x48] sm:$0xff] %vm35, 0.0
      %78 = vst.msk [vmem:[#allocation4 + $0x50] sm:$0xff] %vm35, 0.0
      %79 = vst.msk [vmem:[#allocation4 + $0x58] sm:$0xff] %vm35, 0.0
      %80 = vst.msk [vmem:[#allocation4 + $0x60] sm:$0xff] %vm35, 0.0
      %81 = vst.msk [vmem:[#allocation4 + $0x68] sm:$0xff] %vm35, 0.0
      %82 = vst.msk [vmem:[#allocation4 + $0x70] sm:$0xff] %vm35, 0.0
      %83 = vst.msk [vmem:[#allocation4 + $0x78] sm:$0xff] %vm35, 0.0
    $region25: #{tpu_custom_call.1} parent=1 // pred_fallthru
      _
    %v84 = vld [vmem:[%s0] sm:$0xff]
    %v85 = vld [vmem:[%s0 + $0x8] sm:$0xff]
    %v86 = vld [vmem:[%s0 + $0x10] sm:$0xff]
    %v87 = vld [vmem:[%s0 + $0x18] sm:$0xff]
    %v88 = vld [vmem:[%s0 + $0x20] sm:$0xff]
    %v89 = vld [vmem:[%s0 + $0x28] sm:$0xff]
    %v90 = vld [vmem:[%s0 + $0x30] sm:$0xff]
    %v91 = vld [vmem:[%s0 + $0x38] sm:$0xff]
    %v92 = vld [vmem:[%s0 + $0x40] sm:$0xff]
    %v93 = vld [vmem:[%s0 + $0x48] sm:$0xff]
    %v94 = vld [vmem:[%s0 + $0x50] sm:$0xff]
    %v95 = vld [vmem:[%s0 + $0x58] sm:$0xff]
    %v96 = vld [vmem:[%s0 + $0x60] sm:$0xff]
    %v97 = vld [vmem:[%s0 + $0x68] sm:$0xff]
    %v98 = vld [vmem:[%s0 + $0x70] sm:$0xff]
    %v99 = vld [vmem:[%s0 + $0x78] sm:$0xff]
    %v100 = vld [vmem:[#allocation5] sm:$0xff]
    %v101 = vld [vmem:[#allocation5 + $0x8] sm:$0xff]
    %v102 = vld [vmem:[#allocation5 + $0x10] sm:$0xff]
    %v103 = vld [vmem:[#allocation5 + $0x18] sm:$0xff]
    %v104 = vld [vmem:[#allocation5 + $0x20] sm:$0xff]
    %v105 = vld [vmem:[#allocation5 + $0x28] sm:$0xff]
    %v106 = vld [vmem:[#allocation5 + $0x30] sm:$0xff]
    %v107 = vld [vmem:[#allocation5 + $0x38] sm:$0xff]
    %v108 = vld [vmem:[#allocation5 + $0x40] sm:$0xff]
    %v109 = vld [vmem:[#allocation5 + $0x48] sm:$0xff]
    %v110 = vld [vmem:[#allocation5 + $0x50] sm:$0xff]
    %v111 = vld [vmem:[#allocation5 + $0x58] sm:$0xff]
    %v112 = vld [vmem:[#allocation5 + $0x60] sm:$0xff]
    %v113 = vld [vmem:[#allocation5 + $0x68] sm:$0xff]
    %v114 = vld [vmem:[#allocation5 + $0x70] sm:$0xff]
    %v115 = vld [vmem:[#allocation5 + $0x78] sm:$0xff]
    %116 = vmatprep.subr.mxu0 0.0
    %117 = vmatpush1.xpose.msra.mxu0 %v100
    %118 = vmatprep.subr.mxu0 0.0
    %119 = vmatpush1.xpose.msra.mxu0 %v101
    %120 = vmatprep.subr.mxu0 0.0
    %121 = vmatpush1.xpose.msra.mxu0 %v102
    %122 = vmatprep.subr.mxu0 0.0
    %123 = vmatpush1.xpose.msra.mxu0 %v103
    %124 = vmatprep.subr.mxu0 0.0
    %125 = vmatpush1.xpose.msra.mxu0 %v104
    %126 = vmatprep.subr.mxu0 0.0
    %127 = vmatpush1.xpose.msra.mxu0 %v105
    %128 = vmatprep.subr.mxu0 0.0
    %129 = vmatpush1.xpose.msra.mxu0 %v106
    %130 = vmatprep.subr.mxu0 0.0
    %131 = vmatpush1.xpose.msra.mxu0 %v107
    %132 = vmatprep.subr.mxu0 0.0
    %133 = vmatpush1.xpose.msra.mxu0 %v108
    %134 = vmatprep.subr.mxu0 0.0
    %135 = vmatpush1.xpose.msra.mxu0 %v109
    %136 = vmatprep.subr.mxu0 0.0
    %137 = vmatpush1.xpose.msra.mxu0 %v110
    %138 = vmatprep.subr.mxu0 0.0
    %139 = vmatpush1.xpose.msra.mxu0 %v111
    %140 = vmatprep.subr.mxu0 0.0
    %141 = vmatpush1.xpose.msra.mxu0 %v112
    %142 = vmatprep.subr.mxu0 0.0
    %143 = vmatpush1.xpose.msra.mxu0 %v113
    %144 = vmatprep.subr.mxu0 0.0
    %145 = vmatpush1.xpose.msra.mxu0 %v114
    %146 = vmatprep.subr.mxu0 0.0
    %147 = vmatpush1.xpose.msra.mxu0 %v115
    %148 = vmatprep.subr.mxu0 0.0
    %149 = vmatpush1.xpose.msra.mxu0 0.0
    %150 = vmatprep.subr.mxu0 0.0
    %151 = vmatpush1.xpose.msra.mxu0 0.0
    %152 = vmatprep.subr.mxu0 0.0
    %153 = vmatpush1.xpose.msra.mxu0 0.0
    %154 = vmatprep.subr.mxu0 0.0
    %155 = vmatpush1.xpose.msra.mxu0 0.0
    %156 = vmatprep.subr.mxu0 0.0
    %157 = vmatpush1.xpose.msra.mxu0 0.0
    %158 = vmatprep.subr.mxu0 0.0
    %159 = vmatpush1.xpose.msra.mxu0 0.0
    %160 = vmatprep.subr.mxu0 0.0
    %161 = vmatpush1.xpose.msra.mxu0 0.0
    %162 = vmatprep.subr.mxu0 0.0
    %163 = vmatpush1.xpose.msra.mxu0 0.0
    %164 = vmatprep.subr.mxu0 0.0
    %165 = vmatpush1.xpose.msra.mxu0 0.0
    %166 = vmatprep.subr.mxu0 0.0
    %167 = vmatpush1.xpose.msra.mxu0 0.0
    %168 = vmatprep.subr.mxu0 0.0
    %169 = vmatpush1.xpose.msra.mxu0 0.0
    %170 = vmatprep.subr.mxu0 0.0
    %171 = vmatpush1.xpose.msra.mxu0 0.0
    %172 = vmatprep.subr.mxu0 0.0
    %173 = vmatpush1.xpose.msra.mxu0 0.0
    %174 = vmatprep.subr.mxu0 0.0
    %175 = vmatpush1.xpose.msra.mxu0 0.0
    %176 = vmatprep.subr.mxu0 0.0
    %177 = vmatpush1.xpose.msra.mxu0 0.0
    %178 = vmatprep.subr.mxu0 0.0
    %179 = vmatpush1.xpose.msra.mxu0 0.0
    %180 = vmatprep.mubr.f32.mxu0 0.0
    %181 = vmatmul.mubr.f32.gmra.mrb[0].mxu0 %v84
    %v182 = vpop.f32.mrb[0].mxu0
    %v183 = vadd.f32 0.0, %v182
    %v184 = vpop.f32.mrb[0].mxu0
    %185 = vmatprep.mubr.f32.mxu0 0.0
    %186 = vmatmul.mubr.f32.gmra.mrb[0].mxu0 %v85
    %v187 = vpop.f32.mrb[0].mxu0
    %v188 = vadd.f32 0.0, %v187
    %v189 = vpop.f32.mrb[0].mxu0
    %190 = vmatprep.mubr.f32.mxu0 0.0
    %191 = vmatmul.mubr.f32.gmra.mrb[0].mxu0 %v86
    %v192 = vpop.f32.mrb[0].mxu0
    %v193 = vadd.f32 0.0, %v192
    %v194 = vpop.f32.mrb[0].mxu0
    %195 = vmatprep.mubr.f32.mxu0 0.0
    %196 = vmatmul.mubr.f32.gmra.mrb[0].mxu0 %v87
    %v197 = vpop.f32.mrb[0].mxu0
    %v198 = vadd.f32 0.0, %v197
    %v199 = vpop.f32.mrb[0].mxu0
    %200 = vmatprep.mubr.f32.mxu0 0.0
    %201 = vmatmul.mubr.f32.gmra.mrb[0].mxu0 %v88
    %v202 = vpop.f32.mrb[0].mxu0
    %v203 = vadd.f32 0.0, %v202
    %v204 = vpop.f32.mrb[0].mxu0
    %205 = vmatprep.mubr.f32.mxu0 0.0
    %206 = vmatmul.mubr.f32.gmra.mrb[0].mxu0 %v89
    %v207 = vpop.f32.mrb[0].mxu0
    %v208 = vadd.f32 0.0, %v207
    %v209 = vpop.f32.mrb[0].mxu0
    %210 = vmatprep.mubr.f32.mxu0 0.0
    %211 = vmatmul.mubr.f32.gmra.mrb[0].mxu0 %v90
    %v212 = vpop.f32.mrb[0].mxu0
    %v213 = vadd.f32 0.0, %v212
    %v214 = vpop.f32.mrb[0].mxu0
    %215 = vmatprep.mubr.f32.mxu0 0.0
    %216 = vmatmul.mubr.f32.gmra.mrb[0].mxu0 %v91
    %v217 = vpop.f32.mrb[0].mxu0
    %v218 = vadd.f32 0.0, %v217
    %v219 = vpop.f32.mrb[0].mxu0
    %220 = vmatprep.mubr.f32.mxu0 0.0
    %221 = vmatmul.mubr.f32.gmra.mrb[0].mxu0 %v92
    %v222 = vpop.f32.mrb[0].mxu0
    %v223 = vadd.f32 0.0, %v222
    %v224 = vpop.f32.mrb[0].mxu0
    %225 = vmatprep.mubr.f32.mxu0 0.0
    %226 = vmatmul.mubr.f32.gmra.mrb[0].mxu0 %v93
    %v227 = vpop.f32.mrb[0].mxu0
    %v228 = vadd.f32 0.0, %v227
    %v229 = vpop.f32.mrb[0].mxu0
    %230 = vmatprep.mubr.f32.mxu0 0.0
    %231 = vmatmul.mubr.f32.gmra.mrb[0].mxu0 %v94
    %v232 = vpop.f32.mrb[0].mxu0
    %v233 = vadd.f32 0.0, %v232
    %v234 = vpop.f32.mrb[0].mxu0
    %235 = vmatprep.mubr.f32.mxu0 0.0
    %236 = vmatmul.mubr.f32.gmra.mrb[0].mxu0 %v95
    %v237 = vpop.f32.mrb[0].mxu0
    %v238 = vadd.f32 0.0, %v237
    %v239 = vpop.f32.mrb[0].mxu0
    %240 = vmatprep.mubr.f32.mxu0 0.0
    %241 = vmatmul.mubr.f32.gmra.mrb[0].mxu0 %v96
    %v242 = vpop.f32.mrb[0].mxu0
    %v243 = vadd.f32 0.0, %v242
    %v244 = vpop.f32.mrb[0].mxu0
    %245 = vmatprep.mubr.f32.mxu0 0.0
    %246 = vmatmul.mubr.f32.gmra.mrb[0].mxu0 %v97
    %v247 = vpop.f32.mrb[0].mxu0
    %v248 = vadd.f32 0.0, %v247
    %v249 = vpop.f32.mrb[0].mxu0
    %250 = vmatprep.mubr.f32.mxu0 0.0
    %251 = vmatmul.mubr.f32.gmra.mrb[0].mxu0 %v98
    %v252 = vpop.f32.mrb[0].mxu0
    %v253 = vadd.f32 0.0, %v252
    %v254 = vpop.f32.mrb[0].mxu0
    %255 = vmatprep.mubr.f32.mxu0 0.0
    %256 = vmatmul.mubr.f32.gmra.mrb[0].mxu0 %v99
    %v257 = vpop.f32.mrb[0].mxu0
    %v258 = vadd.f32 0.0, %v257
    %v259 = vpop.f32.mrb[0].mxu0
    %260 = vdwg.mxu0
    %v261 = vsub.f32 %v183, 2.0
    %v262 = vsub.f32 %v188, 2.0
    %v263 = vsub.f32 %v193, 2.0
    %v264 = vsub.f32 %v198, 2.0
    %v265 = vsub.f32 %v203, 2.0
    %v266 = vsub.f32 %v208, 2.0
    %v267 = vsub.f32 %v213, 2.0
    %v268 = vsub.f32 %v218, 2.0
    %v269 = vsub.f32 %v223, 2.0
    %v270 = vsub.f32 %v228, 2.0
    %v271 = vsub.f32 %v233, 2.0
    %v272 = vsub.f32 %v238, 2.0
    %v273 = vsub.f32 %v243, 2.0
    %v274 = vsub.f32 %v248, 2.0
    %v275 = vsub.f32 %v253, 2.0
    %v276 = vsub.f32 %v258, 2.0
    %s277 = smul.u32 0, 128
    %v278 = vlaneseq
    %v279 = vshrl.u32 %v278, 7
    %v280 = vadd.s32 %v279, 8
    %v281 = vadd.s32 %v279, 16
    %v282 = vadd.s32 %v279, 24
    %v283 = vadd.s32 %v279, 32
    %v284 = vadd.s32 %v279, 40
    %v285 = vadd.s32 %v279, 48
    %v286 = vadd.s32 %v279, 56
    %v287 = vadd.s32 %v279, 64
    %v288 = vadd.s32 %v279, 72
    %v289 = vadd.s32 %v279, 80
    %v290 = vadd.s32 %v279, 88
    %v291 = vadd.s32 %v279, 96
    %v292 = vadd.s32 %v279, 104
    %v293 = vadd.s32 %v279, 112
    %v294 = vadd.s32 %v279, 120
    %v295 = vstv %s277
    %v296 = vadd.s32 %v295, %v279
    %v297 = vadd.s32 %v295, %v280
    %v298 = vadd.s32 %v295, %v281
    %v299 = vadd.s32 %v295, %v282
    %v300 = vadd.s32 %v295, %v283
    %v301 = vadd.s32 %v295, %v284
    %v302 = vadd.s32 %v295, %v285
    %v303 = vadd.s32 %v295, %v286
    %v304 = vadd.s32 %v295, %v287
    %v305 = vadd.s32 %v295, %v288
    %v306 = vadd.s32 %v295, %v289
    %v307 = vadd.s32 %v295, %v290
    %v308 = vadd.s32 %v295, %v291
    %v309 = vadd.s32 %v295, %v292
    %v310 = vadd.s32 %v295, %v293
    %v311 = vadd.s32 %v295, %v294
    %s312 = smul.u32 0, 128
    %v313 = vlaneseq
    %v314 = vand.u32 %v313, 127
    %v315 = vstv %s312
    %v316 = vadd.s32 %v315, %v314
    %vm317 = vcmp.ne.s32.totalorder %v316, %v296
    %vm318 = vcmp.ne.s32.totalorder %v316, %v297
    %vm319 = vcmp.ne.s32.totalorder %v316, %v298
    %vm320 = vcmp.ne.s32.totalorder %v316, %v299
    %vm321 = vcmp.ne.s32.totalorder %v316, %v300
    %vm322 = vcmp.ne.s32.totalorder %v316, %v301
    %vm323 = vcmp.ne.s32.totalorder %v316, %v302
    %vm324 = vcmp.ne.s32.totalorder %v316, %v303
    %vm325 = vcmp.ne.s32.totalorder %v316, %v304
    %vm326 = vcmp.ne.s32.totalorder %v316, %v305
    %vm327 = vcmp.ne.s32.totalorder %v316, %v306
    %vm328 = vcmp.ne.s32.totalorder %v316, %v307
    %vm329 = vcmp.ne.s32.totalorder %v316, %v308
    %vm330 = vcmp.ne.s32.totalorder %v316, %v309
    %vm331 = vcmp.ne.s32.totalorder %v316, %v310
    %vm332 = vcmp.ne.s32.totalorder %v316, %v311
    %vm333 = vcmp.lt.s32.totalorder %v316, 16
    %vm334 = vmand %vm317, %vm333
    %vm335 = vmand %vm318, %vm333
    %vm336 = vmand %vm319, %vm333
    %vm337 = vmand %vm320, %vm333
    %vm338 = vmand %vm321, %vm333
    %vm339 = vmand %vm322, %vm333
    %vm340 = vmand %vm323, %vm333
    %vm341 = vmand %vm324, %vm333
    %vm342 = vmand %vm325, %vm333
    %vm343 = vmand %vm326, %vm333
    %vm344 = vmand %vm327, %vm333
    %vm345 = vmand %vm328, %vm333
    %vm346 = vmand %vm329, %vm333
    %vm347 = vmand %vm330, %vm333
    %vm348 = vmand %vm331, %vm333
    %vm349 = vmand %vm332, %vm333
    %v350 = vmul.f32 %v261, 1.442695
    %v351 = vpow.pop %v350
    %v352 = vmul.f32 %v262, 1.442695
    %v353 = vpow.pop %v352
    %v354 = vmul.f32 %v263, 1.442695
    %v355 = vpow.pop %v354
    %v356 = vmul.f32 %v264, 1.442695
    %v357 = vpow.pop %v356
    %v358 = vmul.f32 %v265, 1.442695
    %v359 = vpow.pop %v358
    %v360 = vmul.f32 %v266, 1.442695
    %v361 = vpow.pop %v360
    %v362 = vmul.f32 %v267, 1.442695
    %v363 = vpow.pop %v362
    %v364 = vmul.f32 %v268, 1.442695
    %v365 = vpow.pop %v364
    %v366 = vmul.f32 %v269, 1.442695
    %v367 = vpow.pop %v366
    %v368 = vmul.f32 %v270, 1.442695
    %v369 = vpow.pop %v368
    %v370 = vmul.f32 %v271, 1.442695
    %v371 = vpow.pop %v370
    %v372 = vmul.f32 %v272, 1.442695
    %v373 = vpow.pop %v372
    %v374 = vmul.f32 %v273, 1.442695
    %v375 = vpow.pop %v374
    %v376 = vmul.f32 %v274, 1.442695
    %v377 = vpow.pop %v376
    %v378 = vmul.f32 %v275, 1.442695
    %v379 = vpow.pop %v378
    %v380 = vmul.f32 %v276, 1.442695
    %v381 = vpow.pop %v380
    %v382 = vsel %vm334, %v351, 0.0
    %v383 = vsel %vm335, %v353, 0.0
    %v384 = vsel %vm336, %v355, 0.0
    %v385 = vsel %vm337, %v357, 0.0
    %v386 = vsel %vm338, %v359, 0.0
    %v387 = vsel %vm339, %v361, 0.0
    %v388 = vsel %vm340, %v363, 0.0
    %v389 = vsel %vm341, %v365, 0.0
    %v390 = vsel %vm342, %v367, 0.0
    %v391 = vsel %vm343, %v369, 0.0
    %v392 = vsel %vm344, %v371, 0.0
    %v393 = vsel %vm345, %v373, 0.0
    %v394 = vsel %vm346, %v375, 0.0
    %v395 = vsel %vm347, %v377, 0.0
    %v396 = vsel %vm348, %v379, 0.0
    %v397 = vsel %vm349, %v381, 0.0
    %v398 = vld [vmem:[#allocation2] sm:$0xff]
    %v399 = vld [vmem:[#allocation2 + $0x8] sm:$0xff]
    %v400 = vld [vmem:[#allocation2 + $0x10] sm:$0xff]
    %v401 = vld [vmem:[#allocation2 + $0x18] sm:$0xff]
    %v402 = vld [vmem:[#allocation2 + $0x20] sm:$0xff]
    %v403 = vld [vmem:[#allocation2 + $0x28] sm:$0xff]
    %v404 = vld [vmem:[#allocation2 + $0x30] sm:$0xff]
    %v405 = vld [vmem:[#allocation2 + $0x38] sm:$0xff]
    %v406 = vld [vmem:[#allocation2 + $0x40] sm:$0xff]
    %v407 = vld [vmem:[#allocation2 + $0x48] sm:$0xff]
    %v408 = vld [vmem:[#allocation2 + $0x50] sm:$0xff]
    %v409 = vld [vmem:[#allocation2 + $0x58] sm:$0xff]
    %v410 = vld [vmem:[#allocation2 + $0x60] sm:$0xff]
    %v411 = vld [vmem:[#allocation2 + $0x68] sm:$0xff]
    %v412 = vld [vmem:[#allocation2 + $0x70] sm:$0xff]
    %v413 = vld [vmem:[#allocation2 + $0x78] sm:$0xff]
    %414 = vadd.xlane.f32.xlu0 %v382
    %v415 = vpop.xlane.xlu0 %414
    %416 = vadd.xlane.f32.xlu0 %v383
    %v417 = vpop.xlane.xlu0 %416
    %418 = vadd.xlane.f32.xlu0 %v384
    %v419 = vpop.xlane.xlu0 %418
    %420 = vadd.xlane.f32.xlu0 %v385
    %v421 = vpop.xlane.xlu0 %420
    %422 = vadd.xlane.f32.xlu0 %v386
    %v423 = vpop.xlane.xlu0 %422
    %424 = vadd.xlane.f32.xlu0 %v387
    %v425 = vpop.xlane.xlu0 %424
    %426 = vadd.xlane.f32.xlu0 %v388
    %v427 = vpop.xlane.xlu0 %426
    %428 = vadd.xlane.f32.xlu0 %v389
    %v429 = vpop.xlane.xlu0 %428
    %430 = vadd.xlane.f32.xlu0 %v390
    %v431 = vpop.xlane.xlu0 %430
    %432 = vadd.xlane.f32.xlu0 %v391
    %v433 = vpop.xlane.xlu0 %432
    %434 = vadd.xlane.f32.xlu0 %v392
    %v435 = vpop.xlane.xlu0 %434
    %436 = vadd.xlane.f32.xlu0 %v393
    %v437 = vpop.xlane.xlu0 %436
    %438 = vadd.xlane.f32.xlu0 %v394
    %v439 = vpop.xlane.xlu0 %438
    %440 = vadd.xlane.f32.xlu0 %v395
    %v441 = vpop.xlane.xlu0 %440
    %442 = vadd.xlane.f32.xlu0 %v396
    %v443 = vpop.xlane.xlu0 %442
    %444 = vadd.xlane.f32.xlu0 %v397
    %v445 = vpop.xlane.xlu0 %444
    %v446 = vadd.f32 %v398, %v415
    %v447 = vadd.f32 %v399, %v417
    %v448 = vadd.f32 %v400, %v419
    %v449 = vadd.f32 %v401, %v421
    %v450 = vadd.f32 %v402, %v423
    %v451 = vadd.f32 %v403, %v425
    %v452 = vadd.f32 %v404, %v427
    %v453 = vadd.f32 %v405, %v429
    %v454 = vadd.f32 %v406, %v431
    %v455 = vadd.f32 %v407, %v433
    %v456 = vadd.f32 %v408, %v435
    %v457 = vadd.f32 %v409, %v437
    %v458 = vadd.f32 %v410, %v439
    %v459 = vadd.f32 %v411, %v441
    %v460 = vadd.f32 %v412, %v443
    %v461 = vadd.f32 %v413, %v445
    %vm462 = vcmask 7168
    %463 = vst.msk [vmem:[#allocation2] sm:$0xff] %vm462, %v446
    %464 = vst.msk [vmem:[#allocation2 + $0x8] sm:$0xff] %vm462, %v447
    %465 = vst.msk [vmem:[#allocation2 + $0x10] sm:$0xff] %vm462, %v448
    %466 = vst.msk [vmem:[#allocation2 + $0x18] sm:$0xff] %vm462, %v449
    %467 = vst.msk [vmem:[#allocation2 + $0x20] sm:$0xff] %vm462, %v450
    %468 = vst.msk [vmem:[#allocation2 + $0x28] sm:$0xff] %vm462, %v451
    %469 = vst.msk [vmem:[#allocation2 + $0x30] sm:$0xff] %vm462, %v452
    %470 = vst.msk [vmem:[#allocation2 + $0x38] sm:$0xff] %vm462, %v453
    %471 = vst.msk [vmem:[#allocation2 + $0x40] sm:$0xff] %vm462, %v454
    %472 = vst.msk [vmem:[#allocation2 + $0x48] sm:$0xff] %vm462, %v455
    %473 = vst.msk [vmem:[#allocation2 + $0x50] sm:$0xff] %vm462, %v456
    %474 = vst.msk [vmem:[#allocation2 + $0x58] sm:$0xff] %vm462, %v457
    %475 = vst.msk [vmem:[#allocation2 + $0x60] sm:$0xff] %vm462, %v458
    %476 = vst.msk [vmem:[#allocation2 + $0x68] sm:$0xff] %vm462, %v459
    %477 = vst.msk [vmem:[#allocation2 + $0x70] sm:$0xff] %vm462, %v460
    %478 = vst.msk [vmem:[#allocation2 + $0x78] sm:$0xff] %vm462, %v461
    %v479 = vld [vmem:[%s2] sm:$0xff]
    %v480 = vld [vmem:[%s2 + $0x8] sm:$0xff]
    %v481 = vld [vmem:[%s2 + $0x10] sm:$0xff]
    %v482 = vld [vmem:[%s2 + $0x18] sm:$0xff]
    %v483 = vld [vmem:[%s2 + $0x20] sm:$0xff]
    %v484 = vld [vmem:[%s2 + $0x28] sm:$0xff]
    %v485 = vld [vmem:[%s2 + $0x30] sm:$0xff]
    %v486 = vld [vmem:[%s2 + $0x38] sm:$0xff]
    %v487 = vld [vmem:[%s2 + $0x40] sm:$0xff]
    %v488 = vld [vmem:[%s2 + $0x48] sm:$0xff]
    %v489 = vld [vmem:[%s2 + $0x50] sm:$0xff]
    %v490 = vld [vmem:[%s2 + $0x58] sm:$0xff]
    %v491 = vld [vmem:[%s2 + $0x60] sm:$0xff]
    %v492 = vld [vmem:[%s2 + $0x68] sm:$0xff]
    %v493 = vld [vmem:[%s2 + $0x70] sm:$0xff]
    %v494 = vld [vmem:[%s2 + $0x78] sm:$0xff]
    %v495 = vld [vmem:[%s3] sm:$0x1]
    %497 = vset.pattern.permute.xlu0 0
    %498 = vperm.xlu0 %497, %v479
    %v499 = vpop.permute.xlu0 %498
    %502 = vset.pattern.permute.xlu0 0
    %503 = vperm.xlu0 %502, %v480
    %v504 = vpop.permute.xlu0 %503
    %507 = vset.pattern.permute.xlu0 0
    %508 = vperm.xlu0 %507, %v481
    %v509 = vpop.permute.xlu0 %508
    %512 = vset.pattern.permute.xlu0 0
    %513 = vperm.xlu0 %512, %v482
    %v514 = vpop.permute.xlu0 %513
    %517 = vset.pattern.permute.xlu0 0
    %518 = vperm.xlu0 %517, %v483
    %v519 = vpop.permute.xlu0 %518
    %522 = vset.pattern.permute.xlu0 0
    %523 = vperm.xlu0 %522, %v484
    %v524 = vpop.permute.xlu0 %523
    %527 = vset.pattern.permute.xlu0 0
    %528 = vperm.xlu0 %527, %v485
    %v529 = vpop.permute.xlu0 %528
    %532 = vset.pattern.permute.xlu0 0
    %533 = vperm.xlu0 %532, %v486
    %v534 = vpop.permute.xlu0 %533
    %537 = vset.pattern.permute.xlu0 0
    %538 = vperm.xlu0 %537, %v487
    %v539 = vpop.permute.xlu0 %538
    %542 = vset.pattern.permute.xlu0 0
    %543 = vperm.xlu0 %542, %v488
    %v544 = vpop.permute.xlu0 %543
    %547 = vset.pattern.permute.xlu0 0
    %548 = vperm.xlu0 %547, %v489
    %v549 = vpop.permute.xlu0 %548
    %552 = vset.pattern.permute.xlu0 0
    %553 = vperm.xlu0 %552, %v490
    %v554 = vpop.permute.xlu0 %553
    %557 = vset.pattern.permute.xlu0 0
    %558 = vperm.xlu0 %557, %v491
    %v559 = vpop.permute.xlu0 %558
    %562 = vset.pattern.permute.xlu0 0
    %563 = vperm.xlu0 %562, %v492
    %v564 = vpop.permute.xlu0 %563
    %567 = vset.pattern.permute.xlu0 0
    %568 = vperm.xlu0 %567, %v493
    %v569 = vpop.permute.xlu0 %568
    %572 = vset.pattern.permute.xlu0 0
    %573 = vperm.xlu0 %572, %v494
    %v574 = vpop.permute.xlu0 %573
    %v577 = vlaneseq
    %v578 = vshrl.u32 %v577, 7
    %v579 = vsub.s32 0, %v578
    %v580 = vrot.slane %v495, %v579
    %vm582 = vcmp.eq.f32.partialorder %v499, %v580
    %vm583 = vcmp.eq.f32.partialorder %v504, %v580
    %vm584 = vcmp.eq.f32.partialorder %v509, %v580
    %vm585 = vcmp.eq.f32.partialorder %v514, %v580
    %vm586 = vcmp.eq.f32.partialorder %v519, %v580
    %vm587 = vcmp.eq.f32.partialorder %v524, %v580
    %vm588 = vcmp.eq.f32.partialorder %v529, %v580
    %vm589 = vcmp.eq.f32.partialorder %v534, %v580
    %vm590 = vcmp.eq.f32.partialorder %v539, %v580
    %vm591 = vcmp.eq.f32.partialorder %v544, %v580
    %vm592 = vcmp.eq.f32.partialorder %v549, %v580
    %vm593 = vcmp.eq.f32.partialorder %v554, %v580
    %vm594 = vcmp.eq.f32.partialorder %v559, %v580
    %vm595 = vcmp.eq.f32.partialorder %v564, %v580
    %vm596 = vcmp.eq.f32.partialorder %v569, %v580
    %vm597 = vcmp.eq.f32.partialorder %v574, %v580
    %vm598 = vmand %vm334, %vm582
    %vm599 = vmand %vm335, %vm583
    %vm600 = vmand %vm336, %vm584
    %vm601 = vmand %vm337, %vm585
    %vm602 = vmand %vm338, %vm586
    %vm603 = vmand %vm339, %vm587
    %vm604 = vmand %vm340, %vm588
    %vm605 = vmand %vm341, %vm589
    %vm606 = vmand %vm342, %vm590
    %vm607 = vmand %vm343, %vm591
    %vm608 = vmand %vm344, %vm592
    %vm609 = vmand %vm345, %vm593
    %vm610 = vmand %vm346, %vm594
    %vm611 = vmand %vm347, %vm595
    %vm612 = vmand %vm348, %vm596
    %vm613 = vmand %vm349, %vm597
    %v614 = vsel %vm598, 1.0, 0.0
    %v615 = vsel %vm599, 1.0, 0.0
    %v616 = vsel %vm600, 1.0, 0.0
    %v617 = vsel %vm601, 1.0, 0.0
    %v618 = vsel %vm602, 1.0, 0.0
    %v619 = vsel %vm603, 1.0, 0.0
    %v620 = vsel %vm604, 1.0, 0.0
    %v621 = vsel %vm605, 1.0, 0.0
    %v622 = vsel %vm606, 1.0, 0.0
    %v623 = vsel %vm607, 1.0, 0.0
    %v624 = vsel %vm608, 1.0, 0.0
    %v625 = vsel %vm609, 1.0, 0.0
    %v626 = vsel %vm610, 1.0, 0.0
    %v627 = vsel %vm611, 1.0, 0.0
    %v628 = vsel %vm612, 1.0, 0.0
    %v629 = vsel %vm613, 1.0, 0.0
    %v630 = vld [vmem:[#allocation3] sm:$0xff]
    %v631 = vld [vmem:[#allocation3 + $0x8] sm:$0xff]
    %v632 = vld [vmem:[#allocation3 + $0x10] sm:$0xff]
    %v633 = vld [vmem:[#allocation3 + $0x18] sm:$0xff]
    %v634 = vld [vmem:[#allocation3 + $0x20] sm:$0xff]
    %v635 = vld [vmem:[#allocation3 + $0x28] sm:$0xff]
    %v636 = vld [vmem:[#allocation3 + $0x30] sm:$0xff]
    %v637 = vld [vmem:[#allocation3 + $0x38] sm:$0xff]
    %v638 = vld [vmem:[#allocation3 + $0x40] sm:$0xff]
    %v639 = vld [vmem:[#allocation3 + $0x48] sm:$0xff]
    %v640 = vld [vmem:[#allocation3 + $0x50] sm:$0xff]
    %v641 = vld [vmem:[#allocation3 + $0x58] sm:$0xff]
    %v642 = vld [vmem:[#allocation3 + $0x60] sm:$0xff]
    %v643 = vld [vmem:[#allocation3 + $0x68] sm:$0xff]
    %v644 = vld [vmem:[#allocation3 + $0x70] sm:$0xff]
    %v645 = vld [vmem:[#allocation3 + $0x78] sm:$0xff]
    %646 = vadd.xlane.f32.xlu0 %v614
    %v647 = vpop.xlane.xlu0 %646
    %648 = vadd.xlane.f32.xlu0 %v615
    %v649 = vpop.xlane.xlu0 %648
    %650 = vadd.xlane.f32.xlu0 %v616
    %v651 = vpop.xlane.xlu0 %650
    %652 = vadd.xlane.f32.xlu0 %v617
    %v653 = vpop.xlane.xlu0 %652
    %654 = vadd.xlane.f32.xlu0 %v618
    %v655 = vpop.xlane.xlu0 %654
    %656 = vadd.xlane.f32.xlu0 %v619
    %v657 = vpop.xlane.xlu0 %656
    %658 = vadd.xlane.f32.xlu0 %v620
    %v659 = vpop.xlane.xlu0 %658
    %660 = vadd.xlane.f32.xlu0 %v621
    %v661 = vpop.xlane.xlu0 %660
    %662 = vadd.xlane.f32.xlu0 %v622
    %v663 = vpop.xlane.xlu0 %662
    %664 = vadd.xlane.f32.xlu0 %v623
    %v665 = vpop.xlane.xlu0 %664
    %666 = vadd.xlane.f32.xlu0 %v624
    %v667 = vpop.xlane.xlu0 %666
    %668 = vadd.xlane.f32.xlu0 %v625
    %v669 = vpop.xlane.xlu0 %668
    %670 = vadd.xlane.f32.xlu0 %v626
    %v671 = vpop.xlane.xlu0 %670
    %672 = vadd.xlane.f32.xlu0 %v627
    %v673 = vpop.xlane.xlu0 %672
    %674 = vadd.xlane.f32.xlu0 %v628
    %v675 = vpop.xlane.xlu0 %674
    %676 = vadd.xlane.f32.xlu0 %v629
    %v677 = vpop.xlane.xlu0 %676
    %v678 = vadd.f32 %v630, %v647
    %v679 = vadd.f32 %v631, %v649
    %v680 = vadd.f32 %v632, %v651
    %v681 = vadd.f32 %v633, %v653
    %v682 = vadd.f32 %v634, %v655
    %v683 = vadd.f32 %v635, %v657
    %v684 = vadd.f32 %v636, %v659
    %v685 = vadd.f32 %v637, %v661
    %v686 = vadd.f32 %v638, %v663
    %v687 = vadd.f32 %v639, %v665
    %v688 = vadd.f32 %v640, %v667
    %v689 = vadd.f32 %v641, %v669
    %v690 = vadd.f32 %v642, %v671
    %v691 = vadd.f32 %v643, %v673
    %v692 = vadd.f32 %v644, %v675
    %v693 = vadd.f32 %v645, %v677
    %694 = vst.msk [vmem:[#allocation3] sm:$0xff] %vm462, %v678
    %695 = vst.msk [vmem:[#allocation3 + $0x8] sm:$0xff] %vm462, %v679
    %696 = vst.msk [vmem:[#allocation3 + $0x10] sm:$0xff] %vm462, %v680
    %697 = vst.msk [vmem:[#allocation3 + $0x18] sm:$0xff] %vm462, %v681
    %698 = vst.msk [vmem:[#allocation3 + $0x20] sm:$0xff] %vm462, %v682
    %699 = vst.msk [vmem:[#allocation3 + $0x28] sm:$0xff] %vm462, %v683
    %700 = vst.msk [vmem:[#allocation3 + $0x30] sm:$0xff] %vm462, %v684
    %701 = vst.msk [vmem:[#allocation3 + $0x38] sm:$0xff] %vm462, %v685
    %702 = vst.msk [vmem:[#allocation3 + $0x40] sm:$0xff] %vm462, %v686
    %703 = vst.msk [vmem:[#allocation3 + $0x48] sm:$0xff] %vm462, %v687
    %704 = vst.msk [vmem:[#allocation3 + $0x50] sm:$0xff] %vm462, %v688
    %705 = vst.msk [vmem:[#allocation3 + $0x58] sm:$0xff] %vm462, %v689
    %706 = vst.msk [vmem:[#allocation3 + $0x60] sm:$0xff] %vm462, %v690
    %707 = vst.msk [vmem:[#allocation3 + $0x68] sm:$0xff] %vm462, %v691
    %708 = vst.msk [vmem:[#allocation3 + $0x70] sm:$0xff] %vm462, %v692
    %709 = vst.msk [vmem:[#allocation3 + $0x78] sm:$0xff] %vm462, %v693
    %v710 = vld [vmem:[#allocation4] sm:$0xff]
    %v711 = vld [vmem:[#allocation4 + $0x8] sm:$0xff]
    %v712 = vld [vmem:[#allocation4 + $0x10] sm:$0xff]
    %v713 = vld [vmem:[#allocation4 + $0x18] sm:$0xff]
    %v714 = vld [vmem:[#allocation4 + $0x20] sm:$0xff]
    %v715 = vld [vmem:[#allocation4 + $0x28] sm:$0xff]
    %v716 = vld [vmem:[#allocation4 + $0x30] sm:$0xff]
    %v717 = vld [vmem:[#allocation4 + $0x38] sm:$0xff]
    %v718 = vld [vmem:[#allocation4 + $0x40] sm:$0xff]
    %v719 = vld [vmem:[#allocation4 + $0x48] sm:$0xff]
    %v720 = vld [vmem:[#allocation4 + $0x50] sm:$0xff]
    %v721 = vld [vmem:[#allocation4 + $0x58] sm:$0xff]
    %v722 = vld [vmem:[#allocation4 + $0x60] sm:$0xff]
    %v723 = vld [vmem:[#allocation4 + $0x68] sm:$0xff]
    %v724 = vld [vmem:[#allocation4 + $0x70] sm:$0xff]
    %v725 = vld [vmem:[#allocation4 + $0x78] sm:$0xff]
    %v726 = vmul.f32 %v614, %v261
    %v727 = vmul.f32 %v615, %v262
    %v728 = vmul.f32 %v616, %v263
    %v729 = vmul.f32 %v617, %v264
    %v730 = vmul.f32 %v618, %v265
    %v731 = vmul.f32 %v619, %v266
    %v732 = vmul.f32 %v620, %v267
    %v733 = vmul.f32 %v621, %v268
    %v734 = vmul.f32 %v622, %v269
    %v735 = vmul.f32 %v623, %v270
    %v736 = vmul.f32 %v624, %v271
    %v737 = vmul.f32 %v625, %v272
    %v738 = vmul.f32 %v626, %v273
    %v739 = vmul.f32 %v627, %v274
    %v740 = vmul.f32 %v628, %v275
    %v741 = vmul.f32 %v629, %v276
    %742 = vadd.xlane.f32.xlu0 %v726
    %v743 = vpop.xlane.xlu0 %742
    %744 = vadd.xlane.f32.xlu0 %v727
    %v745 = vpop.xlane.xlu0 %744
    %746 = vadd.xlane.f32.xlu0 %v728
    %v747 = vpop.xlane.xlu0 %746
    %748 = vadd.xlane.f32.xlu0 %v729
    %v749 = vpop.xlane.xlu0 %748
    %750 = vadd.xlane.f32.xlu0 %v730
    %v751 = vpop.xlane.xlu0 %750
    %752 = vadd.xlane.f32.xlu0 %v731
    %v753 = vpop.xlane.xlu0 %752
    %754 = vadd.xlane.f32.xlu0 %v732
    %v755 = vpop.xlane.xlu0 %754
    %756 = vadd.xlane.f32.xlu0 %v733
    %v757 = vpop.xlane.xlu0 %756
    %758 = vadd.xlane.f32.xlu0 %v734
    %v759 = vpop.xlane.xlu0 %758
    %760 = vadd.xlane.f32.xlu0 %v735
    %v761 = vpop.xlane.xlu0 %760
    %762 = vadd.xlane.f32.xlu0 %v736
    %v763 = vpop.xlane.xlu0 %762
    %764 = vadd.xlane.f32.xlu0 %v737
    %v765 = vpop.xlane.xlu0 %764
    %766 = vadd.xlane.f32.xlu0 %v738
    %v767 = vpop.xlane.xlu0 %766
    %768 = vadd.xlane.f32.xlu0 %v739
    %v769 = vpop.xlane.xlu0 %768
    %770 = vadd.xlane.f32.xlu0 %v740
    %v771 = vpop.xlane.xlu0 %770
    %772 = vadd.xlane.f32.xlu0 %v741
    %v773 = vpop.xlane.xlu0 %772
    %v774 = vadd.f32 %v710, %v743
    %v775 = vadd.f32 %v711, %v745
    %v776 = vadd.f32 %v712, %v747
    %v777 = vadd.f32 %v713, %v749
    %v778 = vadd.f32 %v714, %v751
    %v779 = vadd.f32 %v715, %v753
    %v780 = vadd.f32 %v716, %v755
    %v781 = vadd.f32 %v717, %v757
    %v782 = vadd.f32 %v718, %v759
    %v783 = vadd.f32 %v719, %v761
    %v784 = vadd.f32 %v720, %v763
    %v785 = vadd.f32 %v721, %v765
    %v786 = vadd.f32 %v722, %v767
    %v787 = vadd.f32 %v723, %v769
    %v788 = vadd.f32 %v724, %v771
    %v789 = vadd.f32 %v725, %v773
    %790 = vst.msk [vmem:[#allocation4] sm:$0xff] %vm462, %v774
    %791 = vst.msk [vmem:[#allocation4 + $0x8] sm:$0xff] %vm462, %v775
    %792 = vst.msk [vmem:[#allocation4 + $0x10] sm:$0xff] %vm462, %v776
    %793 = vst.msk [vmem:[#allocation4 + $0x18] sm:$0xff] %vm462, %v777
    %794 = vst.msk [vmem:[#allocation4 + $0x20] sm:$0xff] %vm462, %v778
    %795 = vst.msk [vmem:[#allocation4 + $0x28] sm:$0xff] %vm462, %v779
    %796 = vst.msk [vmem:[#allocation4 + $0x30] sm:$0xff] %vm462, %v780
    %797 = vst.msk [vmem:[#allocation4 + $0x38] sm:$0xff] %vm462, %v781
    %798 = vst.msk [vmem:[#allocation4 + $0x40] sm:$0xff] %vm462, %v782
    %799 = vst.msk [vmem:[#allocation4 + $0x48] sm:$0xff] %vm462, %v783
    %800 = vst.msk [vmem:[#allocation4 + $0x50] sm:$0xff] %vm462, %v784
    %801 = vst.msk [vmem:[#allocation4 + $0x58] sm:$0xff] %vm462, %v785
    %802 = vst.msk [vmem:[#allocation4 + $0x60] sm:$0xff] %vm462, %v786
    %803 = vst.msk [vmem:[#allocation4 + $0x68] sm:$0xff] %vm462, %v787
    %804 = vst.msk [vmem:[#allocation4 + $0x70] sm:$0xff] %vm462, %v788
    %805 = vst.msk [vmem:[#allocation4 + $0x78] sm:$0xff] %vm462, %v789
    // Predicated region
    $region26: #{tpu_custom_call.1} parent=1 // pred_check
      %p806 = pneg %p31
    $region27: #{tpu_custom_call.1} parent=1 // pred_check_branch
      %808 = sbr.rel (%p806) target = $region29
    $region28: #{tpu_custom_call.1} parent=1 // pred_region
      %v809 = vld [vmem:[#allocation4] sm:$0xff]
      %v810 = vld [vmem:[#allocation4 + $0x8] sm:$0xff]
      %v811 = vld [vmem:[#allocation4 + $0x10] sm:$0xff]
      %v812 = vld [vmem:[#allocation4 + $0x18] sm:$0xff]
      %v813 = vld [vmem:[#allocation4 + $0x20] sm:$0xff]
      %v814 = vld [vmem:[#allocation4 + $0x28] sm:$0xff]
      %v815 = vld [vmem:[#allocation4 + $0x30] sm:$0xff]
      %v816 = vld [vmem:[#allocation4 + $0x38] sm:$0xff]
      %v817 = vld [vmem:[#allocation4 + $0x40] sm:$0xff]
      %v818 = vld [vmem:[#allocation4 + $0x48] sm:$0xff]
      %v819 = vld [vmem:[#allocation4 + $0x50] sm:$0xff]
      %v820 = vld [vmem:[#allocation4 + $0x58] sm:$0xff]
      %v821 = vld [vmem:[#allocation4 + $0x60] sm:$0xff]
      %v822 = vld [vmem:[#allocation4 + $0x68] sm:$0xff]
      %v823 = vld [vmem:[#allocation4 + $0x70] sm:$0xff]
      %v824 = vld [vmem:[#allocation4 + $0x78] sm:$0xff]
      %v825 = vld [vmem:[#allocation3] sm:$0xff]
      %v826 = vld [vmem:[#allocation3 + $0x8] sm:$0xff]
      %v827 = vld [vmem:[#allocation3 + $0x10] sm:$0xff]
      %v828 = vld [vmem:[#allocation3 + $0x18] sm:$0xff]
      %v829 = vld [vmem:[#allocation3 + $0x20] sm:$0xff]
      %v830 = vld [vmem:[#allocation3 + $0x28] sm:$0xff]
      %v831 = vld [vmem:[#allocation3 + $0x30] sm:$0xff]
      %v832 = vld [vmem:[#allocation3 + $0x38] sm:$0xff]
      %v833 = vld [vmem:[#allocation3 + $0x40] sm:$0xff]
      %v834 = vld [vmem:[#allocation3 + $0x48] sm:$0xff]
      %v835 = vld [vmem:[#allocation3 + $0x50] sm:$0xff]
      %v836 = vld [vmem:[#allocation3 + $0x58] sm:$0xff]
      %v837 = vld [vmem:[#allocation3 + $0x60] sm:$0xff]
      %v838 = vld [vmem:[#allocation3 + $0x68] sm:$0xff]
      %v839 = vld [vmem:[#allocation3 + $0x70] sm:$0xff]
      %v840 = vld [vmem:[#allocation3 + $0x78] sm:$0xff]
      %v841 = vld [vmem:[#allocation2] sm:$0xff]
      %v842 = vld [vmem:[#allocation2 + $0x8] sm:$0xff]
      %v843 = vld [vmem:[#allocation2 + $0x10] sm:$0xff]
      %v844 = vld [vmem:[#allocation2 + $0x18] sm:$0xff]
      %v845 = vld [vmem:[#allocation2 + $0x20] sm:$0xff]
      %v846 = vld [vmem:[#allocation2 + $0x28] sm:$0xff]
      %v847 = vld [vmem:[#allocation2 + $0x30] sm:$0xff]
      %v848 = vld [vmem:[#allocation2 + $0x38] sm:$0xff]
      %v849 = vld [vmem:[#allocation2 + $0x40] sm:$0xff]
      %v850 = vld [vmem:[#allocation2 + $0x48] sm:$0xff]
      %v851 = vld [vmem:[#allocation2 + $0x50] sm:$0xff]
      %v852 = vld [vmem:[#allocation2 + $0x58] sm:$0xff]
      %v853 = vld [vmem:[#allocation2 + $0x60] sm:$0xff]
      %v854 = vld [vmem:[#allocation2 + $0x68] sm:$0xff]
      %v855 = vld [vmem:[#allocation2 + $0x70] sm:$0xff]
      %v856 = vld [vmem:[#allocation2 + $0x78] sm:$0xff]
      %v857 = vlog2.pop %v841
      %v858 = vmul.f32 %v857, 0.6931472
      %v859 = vlog2.pop %v842
      %v860 = vmul.f32 %v859, 0.6931472
      %v861 = vlog2.pop %v843
      %v862 = vmul.f32 %v861, 0.6931472
      %v863 = vlog2.pop %v844
      %v864 = vmul.f32 %v863, 0.6931472
      %v865 = vlog2.pop %v845
      %v866 = vmul.f32 %v865, 0.6931472
      %v867 = vlog2.pop %v846
      %v868 = vmul.f32 %v867, 0.6931472
      %v869 = vlog2.pop %v847
      %v870 = vmul.f32 %v869, 0.6931472
      %v871 = vlog2.pop %v848
      %v872 = vmul.f32 %v871, 0.6931472
      %v873 = vlog2.pop %v849
      %v874 = vmul.f32 %v873, 0.6931472
      %v875 = vlog2.pop %v850
      %v876 = vmul.f32 %v875, 0.6931472
      %v877 = vlog2.pop %v851
      %v878 = vmul.f32 %v877, 0.6931472
      %v879 = vlog2.pop %v852
      %v880 = vmul.f32 %v879, 0.6931472
      %v881 = vlog2.pop %v853
      %v882 = vmul.f32 %v881, 0.6931472
      %v883 = vlog2.pop %v854
      %v884 = vmul.f32 %v883, 0.6931472
      %v885 = vlog2.pop %v855
      %v886 = vmul.f32 %v885, 0.6931472
      %v887 = vlog2.pop %v856
      %v888 = vmul.f32 %v887, 0.6931472
      %v889 = vmul.f32 %v825, %v858
      %v890 = vmul.f32 %v826, %v860
      %v891 = vmul.f32 %v827, %v862
      %v892 = vmul.f32 %v828, %v864
      %v893 = vmul.f32 %v829, %v866
      %v894 = vmul.f32 %v830, %v868
      %v895 = vmul.f32 %v831, %v870
      %v896 = vmul.f32 %v832, %v872
      %v897 = vmul.f32 %v833, %v874
      %v898 = vmul.f32 %v834, %v876
      %v899 = vmul.f32 %v835, %v878
      %v900 = vmul.f32 %v836, %v880
      %v901 = vmul.f32 %v837, %v882
      %v902 = vmul.f32 %v838, %v884
      %v903 = vmul.f32 %v839, %v886
      %v904 = vmul.f32 %v840, %v888
      %v905 = vsub.f32 %v809, %v889
      %v906 = vsub.f32 %v810, %v890
      %v907 = vsub.f32 %v811, %v891
      %v908 = vsub.f32 %v812, %v892
      %v909 = vsub.f32 %v813, %v893
      %v910 = vsub.f32 %v814, %v894
      %v911 = vsub.f32 %v815, %v895
      %v912 = vsub.f32 %v816, %v896
      %v913 = vsub.f32 %v817, %v897
      %v914 = vsub.f32 %v818, %v898
      %v915 = vsub.f32 %v819, %v899
      %v916 = vsub.f32 %v820, %v900
      %v917 = vsub.f32 %v821, %v901
      %v918 = vsub.f32 %v822, %v902
      %v919 = vsub.f32 %v823, %v903
      %v920 = vsub.f32 %v824, %v904
      %v921 = vrcp.pop %v825
      %v922 = vmul.f32 %v905, %v921
      %v923 = vrcp.pop %v826
      %v924 = vmul.f32 %v906, %v923
      %v925 = vrcp.pop %v827
      %v926 = vmul.f32 %v907, %v925
      %v927 = vrcp.pop %v828
      %v928 = vmul.f32 %v908, %v927
      %v929 = vrcp.pop %v829
      %v930 = vmul.f32 %v909, %v929
      %v931 = vrcp.pop %v830
      %v932 = vmul.f32 %v910, %v931
      %v933 = vrcp.pop %v831
      %v934 = vmul.f32 %v911, %v933
      %v935 = vrcp.pop %v832
      %v936 = vmul.f32 %v912, %v935
      %v937 = vrcp.pop %v833
      %v938 = vmul.f32 %v913, %v937
      %v939 = vrcp.pop %v834
      %v940 = vmul.f32 %v914, %v939
      %v941 = vrcp.pop %v835
      %v942 = vmul.f32 %v915, %v941
      %v943 = vrcp.pop %v836
      %v944 = vmul.f32 %v916, %v943
      %v945 = vrcp.pop %v837
      %v946 = vmul.f32 %v917, %v945
      %v947 = vrcp.pop %v838
      %v948 = vmul.f32 %v918, %v947
      %v949 = vrcp.pop %v839
      %v950 = vmul.f32 %v919, %v949
      %v951 = vrcp.pop %v840
      %v952 = vmul.f32 %v920, %v951
      %953 = vst.msk [vmem:[%s4] sm:$0xff] %vm462, %v922
      %954 = vst.msk [vmem:[%s4 + $0x8] sm:$0xff] %vm462, %v924
      %955 = vst.msk [vmem:[%s4 + $0x10] sm:$0xff] %vm462, %v926
      %956 = vst.msk [vmem:[%s4 + $0x18] sm:$0xff] %vm462, %v928
      %957 = vst.msk [vmem:[%s4 + $0x20] sm:$0xff] %vm462, %v930
      %958 = vst.msk [vmem:[%s4 + $0x28] sm:$0xff] %vm462, %v932
      %959 = vst.msk [vmem:[%s4 + $0x30] sm:$0xff] %vm462, %v934
      %960 = vst.msk [vmem:[%s4 + $0x38] sm:$0xff] %vm462, %v936
      %961 = vst.msk [vmem:[%s4 + $0x40] sm:$0xff] %vm462, %v938
      %962 = vst.msk [vmem:[%s4 + $0x48] sm:$0xff] %vm462, %v940
      %963 = vst.msk [vmem:[%s4 + $0x50] sm:$0xff] %vm462, %v942
      %964 = vst.msk [vmem:[%s4 + $0x58] sm:$0xff] %vm462, %v944
      %965 = vst.msk [vmem:[%s4 + $0x60] sm:$0xff] %vm462, %v946
      %966 = vst.msk [vmem:[%s4 + $0x68] sm:$0xff] %vm462, %v948
      %967 = vst.msk [vmem:[%s4 + $0x70] sm:$0xff] %vm462, %v950
      %968 = vst.msk [vmem:[%s4 + $0x78] sm:$0xff] %vm462, %v952
    $region29: #{tpu_custom_call.1} parent=1 // pred_fallthru
      _
    // Predicated region
    $region30: #{tpu_custom_call.1} parent=1 // pred_check
      _
    $region31: #{tpu_custom_call.1} parent=1 // pred_check_branch
      %970 = sbr.rel (0) target = $region33
    $region32: #{tpu_custom_call.1} parent=1 // pred_region
      _
    $region33: #{tpu_custom_call.1} parent=1 // pred_fallthru
      _
    // Predicated region
    $region34: #{tpu_custom_call.1} parent=1 // pred_check
      _
    $region35: #{tpu_custom_call.1} parent=1 // pred_check_branch
      %972 = sbr.rel (0) target = $region37
    $region36: #{tpu_custom_call.1} parent=1 // pred_region
      _
    $region37: #{tpu_custom_call.1} parent=1 // pred_fallthru
      _
    %973 = vsyncpa [#allocation6], 1

</llo_original>
